<compile_context>
chip_gen: v7x
topology: tpu7x:2x2x1
jax: 0.10.0
libtpu: 0.0.40
codegen_flags: <defaults>
</compile_context>

<pallas_src>
import functools

import jax
import jax.numpy as jnp
from jax.experimental import pallas as pl
from jax.experimental.pallas import tpu as pltpu


# --------------------------------------------------------------------------- #
# Kernel
# --------------------------------------------------------------------------- #
def _celltype_poisson_kernel(out_ref, tgt_ref, scale_ref, acc_ref, *, bias, lag):
    """One (neuron-tile, batch-block, time-block) grid step.

    out_ref   : (Bb, Tt, nt)        model output block (native dtype)
    tgt_ref   : (Bb, Tt + lag, nt)  target block (native dtype; lag==0 when
                                    the wrapper pre-sliced for time tiling)
    scale_ref : (Bb, 1, nt)         per-(batch, neuron) group weight, f32
    acc_ref   : (1, nt)             resident per-neuron partial sum for this
                                    batch block (f32 output, accumulated
                                    across the trailing time-block axis)
    """
    @pl.when(pl.program_id(2) == 0)
    def _init():
        acc_ref[...] = jnp.zeros_like(acc_ref)

    o = out_ref[...].astype(jnp.float32)                      # (Bb, Tt, nt)
    tt = o.shape[1]
    # lag-aligned target: static in-VMEM slice (no-op when lag == 0)
    t = tgt_ref[:, lag:lag + tt, :].astype(jnp.float32)       # (Bb, Tt, nt)

    loss = o - t * jnp.log(o + bias)                          # Poisson NLL (up to const)
    per_bn = loss.sum(axis=1)                                 # time reduce -> (Bb, nt)
    # scale multiply hoisted out of the per-element path: sum_t(l)*s == sum_t(l*s)
    scaled = per_bn * scale_ref[:, 0, :]                      # (Bb, nt)
    acc_ref[...] += scaled.sum(axis=0, keepdims=True)         # (1, nt)


# --------------------------------------------------------------------------- #
# Chip-aware sizing helpers
# --------------------------------------------------------------------------- #
def _tpu_vmem_capacity_bytes():
    """Best-effort physical VMEM capacity of the attached TPU (bytes)."""
    try:
        info = pltpu.get_tpu_info()
        cap = getattr(info, "vmem_capacity_bytes", None)
        if cap:
            return int(cap)
    except Exception:
        pass
    kind = ""
    try:
        kind = jax.devices()[0].device_kind.lower()
    except Exception:
        pass
    if "v4" in kind or "v5" in kind or "v6" in kind:
        return 128 << 20
    # v7x (64 MiB per TensorCore) / unknown: be conservative
    return 64 << 20


def _choose_tiling(B, T, T_tgt, N, out_isz, tgt_isz, vmem_budget, dma_target):
    """Pick (Bb, Tt, tgt_block_T, lag_in_block, nt, preslice).

    The honest per-step live-bytes estimate counts both input blocks, the
    scale and accumulator tiles (all double buffered) plus two f32 copies of
    the compute block for the upcast temporaries.
    """
    lag = T_tgt - T

    if N % 128 == 0:
        nt_cands = [d for d in range(N, 0, -128) if N % d == 0]   # lane-dense
    else:
        nt_cands = [N]   # small / unaligned N: full-dim block, no padded copies

    # time options: (Tt, tgt_block_T, lag_in_block, preslice)
    time_opts = [(T, T_tgt, lag, False)]          # preferred: no time tiling
    if T % 8 == 0:
        for d in range(T - 8, 0, -8):             # sublane-aligned divisors of T
            if T % d == 0:
                time_opts.append((d, d, 0, True))
    # TODO(synk): Element-offset time tiling would also cover T % 8 != 0.

    def live_bytes(bb, tt, tgt_t, nt):
        out_blk = bb * tt * nt * out_isz
        tgt_blk = bb * tgt_t * nt * tgt_isz
        scale_blk = bb * nt * 4
        acc_blk = nt * 4
        f32_tmp = 2 * bb * tt * nt * 4            # upcast temporaries
        return 2 * (out_blk + tgt_blk + scale_blk + acc_blk) + f32_tmp

    b_divs = [d for d in range(1, B + 1) if B % d == 0]   # ascending

    best, best_key = None, None
    for (tt, tgt_t, lag_blk, preslice) in time_opts:
        for nt in nt_cands:
            # megacore: if the neuron axis has a single block, keep >=2 batch
            # blocks so the second "parallel" axis can feed the other core.
            need_two_b_blocks = (N // nt) == 1 and B >= 2
            chosen = None
            for bb in b_divs:
                if need_two_b_blocks and bb > B // 2:
                    break
                if live_bytes(bb, tt, tgt_t, nt) > vmem_budget:
                    break   # live bytes grow monotonically with Bb
                chosen = bb
                stream = bb * nt * (tt * out_isz + tgt_t * tgt_isz)
                if stream >= dma_target:
                    break   # big enough to amortize per-step overhead
            if chosen is None:
                continue
            stream = chosen * nt * (tt * out_isz + tgt_t * tgt_isz)
            steps = (N // nt) * (B // chosen) * (T // tt)
            key = (not preslice, min(stream, dma_target), -steps)
            if best_key is None or key > best_key:
                best_key = key
                best = (chosen, tt, tgt_t, lag_blk, nt, preslice)

    if best is None:
        # Nothing fits the honest budget (extreme shapes): fall back to the
        # smallest config and rely on the raised vmem_limit_bytes.
        # TODO(synk): Element-offset time tiling to shrink further.
        tt, tgt_t, lag_blk, preslice = time_opts[-1]
        best = (1, tt, tgt_t, lag_blk, nt_cands[-1], preslice)
    return best


# --------------------------------------------------------------------------- #
# Wrapper
# --------------------------------------------------------------------------- #
def celltype_poisson_loss_3d(output, target, group_assignment, group_counts,
                             *, bias=1e-16, per_neuron=False, avg=False,
                             vmem_budget_bytes=None, dma_target_bytes=None):
    """JAX/Pallas equivalent of CelltypePoissonLoss3d.forward."""
    B, T, N = output.shape
    T_tgt = target.shape[1]
    lag = T_tgt - T
    if lag < 0:
        raise ValueError("target must have at least as many time steps as output")

    # group re-weighting factor (tiny gather -> plain JAX glue), kept in f32
    gc = group_counts.astype(jnp.float32)
    scale = (gc.sum() / gc.shape[0]) / jnp.take(gc, group_assignment - 1)     # (B, N)
    scale = scale.reshape(B, 1, N).astype(jnp.float32)

    out_isz = jnp.dtype(output.dtype).itemsize
    tgt_isz = jnp.dtype(target.dtype).itemsize

    cap = _tpu_vmem_capacity_bytes()
    if vmem_budget_bytes is None:
        vmem_budget_bytes = (cap * 45) // 100          # honest live-bytes budget
    if dma_target_bytes is None:
        dma_target_bytes = (4 << 20) if cap <= (64 << 20) else (8 << 20)
    vmem_limit_bytes = int(min((cap * 3) // 4, 100 << 20))

    Bb, Tt, tgt_t, lag_blk, nt, preslice = _choose_tiling(
        B, T, T_tgt, N, out_isz, tgt_isz, vmem_budget_bytes, dma_target_bytes)

    # Time tiling cannot express the +lag element offset with Blocked indexing,
    # so apply the lag once in HBM in that (rare, long-T) case.
    tgt_used = target[:, lag:, :] if preslice else target

    n_blocks = N // nt
    b_blocks = B // Bb
    t_blocks = T // Tt
    grid = (n_blocks, b_blocks, t_blocks)

    if preslice:
        tgt_index_map = lambda n, b, t: (b, t, n)
    else:
        tgt_index_map = lambda n, b, t: (b, 0, n)

    cost = pl.CostEstimate(
        flops=5 * B * T * N,
        transcendentals=B * T * N,
        bytes_accessed=int(output.size * out_isz + tgt_used.size * tgt_isz
                           + scale.size * 4 + b_blocks * N * 4),
    )

    partials = pl.pallas_call(
        functools.partial(_celltype_poisson_kernel, bias=float(bias), lag=lag_blk),
        out_shape=jax.ShapeDtypeStruct((b_blocks, 1, N), jnp.float32),
        grid=grid,
        in_specs=[
            pl.BlockSpec((Bb, Tt, nt), lambda n, b, t: (b, t, n)),     # output (native dtype)
            pl.BlockSpec((Bb, tgt_t, nt), tgt_index_map),              # target (native dtype)
            pl.BlockSpec((Bb, 1, nt), lambda n, b, t: (b, 0, n)),      # per-(b, n) scale
        ],
        out_specs=pl.BlockSpec((None, 1, nt), lambda n, b, t: (b, 0, n)),
        compiler_params=pltpu.CompilerParams(
            dimension_semantics=("parallel", "parallel", "arbitrary"),
            vmem_limit_bytes=vmem_limit_bytes),
        cost_estimate=cost,
    )(output, tgt_used, scale)

    per_neuron_sum = partials.sum(axis=(0, 1))          # (N,)
    if not per_neuron:
        total = per_neuron_sum.sum()
        return total / (B * T * N) if avg else total
    # mean over (batch * time) per neuron
    return per_neuron_sum / (B * T)


# --------------------------------------------------------------------------- #
# Pure-JAX reference (mirrors the PyTorch module, f32 compute)
# --------------------------------------------------------------------------- #
def _reference(output, target, group_assignment, group_counts,
               *, bias=1e-16, per_neuron=False, avg=False):
    o = output.astype(jnp.float32)
    t = target.astype(jnp.float32)
    lag = t.shape[1] - o.shape[1]
    loss = o - t[:, lag:, :] * jnp.log(o + bias)
    gc = group_counts.astype(jnp.float32)
    scale = (gc.sum() / gc.shape[0]) / jnp.take(gc, group_assignment - 1)
    loss = loss * scale[:, None, :]
    if not per_neuron:
        return loss.mean() if avg else loss.sum()
    return loss.reshape(-1, loss.shape[-1]).mean(axis=0)


if __name__ == "__main__":
    key = jax.random.PRNGKey(0)
    k_out, k_tgt, k_grp, k_cnt = jax.random.split(key, 4)

    # --- case 1: small lane-sparse N (full-dim block, batch split in parallel)
    B, T_out, lag, N, G = 2, 8, 2, 16, 3
    T_tgt = T_out + lag

    output = jax.random.uniform(k_out, (B, T_out, N), jnp.float32,
                                minval=0.05, maxval=2.0)
    target = jax.random.uniform(k_tgt, (B, T_tgt, N), jnp.float32,
                                minval=0.0, maxval=3.0)
    group_assignment = jax.random.randint(k_grp, (B, N), 1, G + 1, jnp.int32)
    group_counts = jax.random.randint(k_cnt, (G,), 1, 10,
                                      jnp.int32).astype(jnp.float32)

    loss = celltype_poisson_loss_3d(output, target, group_assignment,
                                    group_counts)
    jax.block_until_ready(loss)
    ref = _reference(output, target, group_assignment, group_counts)
    assert jnp.allclose(loss, ref, rtol=1e-4, atol=1e-3), (loss, ref)

    pn = celltype_poisson_loss_3d(output, target, group_assignment,
                                  group_counts, per_neuron=True)
    pn_ref = _reference(output, target, group_assignment, group_counts,
                        per_neuron=True)
    jax.block_until_ready(pn)
    assert jnp.allclose(pn, pn_ref, rtol=1e-4, atol=1e-3)

    av = celltype_poisson_loss_3d(output, target, group_assignment,
                                  group_counts, avg=True)
    av_ref = _reference(output, target, group_assignment, group_counts,
                        avg=True)
    jax.block_until_ready(av)
    assert jnp.allclose(av, av_ref, rtol=1e-4, atol=1e-4)

    # --- case 2: lane-dense N (multiple of 128), bf16 inputs, multiple N tiles
    B2, T2, lag2, N2, G2 = 2, 16, 3, 256, 4
    T2_tgt = T2 + lag2
    ko, kt, kg, kc = jax.random.split(jax.random.PRNGKey(1), 4)
    out2 = jax.random.uniform(ko, (B2, T2, N2), jnp.float32,
                              minval=0.05, maxval=2.0).astype(jnp.bfloat16)
    tgt2 = jax.random.uniform(kt, (B2, T2_tgt, N2), jnp.float32,
                              minval=0.0, maxval=3.0).astype(jnp.bfloat16)
    ga2 = jax.random.randint(kg, (B2, N2), 1, G2 + 1, jnp.int32)
    gc2 = jax.random.randint(kc, (G2,), 1, 10, jnp.int32).astype(jnp.float32)

    # tiny per-step budget forces nt=128 -> 2 neuron tiles (parallel N axis,
    # native-bf16 streaming, honest-budget tile rejection path).
    loss2 = celltype_poisson_loss_3d(out2, tgt2, ga2, gc2,
                                     vmem_budget_bytes=40 * 1024)
    jax.block_until_ready(loss2)
    ref2 = _reference(out2, tgt2, ga2, gc2)
    assert jnp.allclose(loss2, ref2, rtol=1e-3, atol=1e-2), (loss2, ref2)

    # --- case 3: force the time-tiling / accumulator path (long-T guard) -----
    B3, T3, lag3, N3, G3 = 2, 32, 5, 128, 5
    T3_tgt = T3 + lag3
    ko3, kt3, kg3, kc3 = jax.random.split(jax.random.PRNGKey(2), 4)
    out3 = jax.random.uniform(ko3, (B3, T3, N3), jnp.float32,
                              minval=0.05, maxval=2.0)
    tgt3 = jax.random.uniform(kt3, (B3, T3_tgt, N3), jnp.float32,
                              minval=0.0, maxval=3.0)
    ga3 = jax.random.randint(kg3, (B3, N3), 1, G3 + 1, jnp.int32)
    gc3 = jax.random.randint(kc3, (G3,), 1, 10, jnp.int32).astype(jnp.float32)

    # budget small enough that the full-T block is rejected -> Tt < T,
    # grid (1, 2, 2), resident accumulator across the trailing time axis.
    loss3 = celltype_poisson_loss_3d(out3, tgt3, ga3, gc3,
                                     vmem_budget_bytes=64 * 1024)
    jax.block_until_ready(loss3)
    ref3 = _reference(out3, tgt3, ga3, gc3)
    assert jnp.allclose(loss3, ref3, rtol=1e-4, atol=1e-2), (loss3, ref3)

    pn3 = celltype_poisson_loss_3d(out3, tgt3, ga3, gc3, per_neuron=True,
                                   vmem_budget_bytes=64 * 1024)
    pn3_ref = _reference(out3, tgt3, ga3, gc3, per_neuron=True)
    jax.block_until_ready(pn3)
    assert jnp.allclose(pn3, pn3_ref, rtol=1e-4, atol=1e-3)

    print("KERNEL_OK")
</pallas_src>

<mosaic_0001>
module attributes {stable_mosaic.version = 11 : i64} {
  func.func @_celltype_poisson_kernel(%arg0: i32, %arg1: i32, %arg2: i32, %arg3: memref<1x8x16xf32, #tpu.memory_space<vmem>>, %arg4: memref<1x10x16xf32, #tpu.memory_space<vmem>>, %arg5: memref<1x1x16xf32, #tpu.memory_space<vmem>>, %arg6: memref<1x1x16xf32, #tpu.memory_space<vmem>>) attributes {dimension_semantics = [#tpu.dimension_semantics<parallel>, #tpu.dimension_semantics<parallel>, #tpu.dimension_semantics<arbitrary>], iteration_bounds = array<i64: 1, 2, 1>, scalar_prefetch = 0 : i64, scratch_operands = 0 : i64, tpu.core_type = #tpu.core_type<tc>, window_params = [{transform_indices = @transform_0, window_bounds = array<i64: 1, 8, 16>}, {transform_indices = @transform_1, window_bounds = array<i64: 1, 10, 16>}, {transform_indices = @transform_2, window_bounds = array<i64: 1, 1, 16>}, {transform_indices = @transform_3, window_bounds = array<i64: 1, 1, 16>}]} {
    %c0_i32 = arith.constant 0 : i32
    %0 = arith.cmpi eq, %arg2, %c0_i32 : i32
    %1 = arith.extui %0 : i1 to i32
    %c0_i32_0 = arith.constant 0 : i32
    %2 = arith.cmpi ne, %1, %c0_i32_0 : i32
    scf.if %2 {
      %cst_16 = arith.constant 0.000000e+00 : f32
      %22 = vector.broadcast %cst_16 : f32 to vector<1x16xf32>
      %c0_17 = arith.constant 0 : index
      %c0_18 = arith.constant 0 : index
      %c0_19 = arith.constant 0 : index
      %23 = vector.load %arg6[%c0_17, %c0_18, %c0_19] : memref<1x1x16xf32, #tpu.memory_space<vmem>>, vector<1x1x16xf32>
      %24 = vector.shape_cast %23 : vector<1x1x16xf32> to vector<1x16xf32>
      %25 = vector.shape_cast %22 : vector<1x16xf32> to vector<1x1x16xf32>
      tpu.vector_store %arg6[%c0_17, %c0_18, %c0_19], %25 {strides = array<i32>} : memref<1x1x16xf32, #tpu.memory_space<vmem>>, vector<1x1x16xf32>,
    } else {
    }
    %c0 = arith.constant 0 : index
    %c0_1 = arith.constant 0 : index
    %c0_2 = arith.constant 0 : index
    %3 = vector.load %arg3[%c0, %c0_1, %c0_2] : memref<1x8x16xf32, #tpu.memory_space<vmem>>, vector<1x8x16xf32>
    %c0_3 = arith.constant 0 : index
    %c2 = arith.constant 2 : index
    %c0_4 = arith.constant 0 : index
    %4 = vector.load %arg4[%c0_3, %c2, %c0_4] : memref<1x10x16xf32, #tpu.memory_space<vmem>>, vector<1x8x16xf32>
    %cst = arith.constant 1.000000e-16 : f32
    %5 = vector.broadcast %cst : f32 to vector<1x8x16xf32>
    %6 = arith.addf %3, %5 : vector<1x8x16xf32>
    %7 = math.log %6 : vector<1x8x16xf32>
    %8 = arith.mulf %4, %7 : vector<1x8x16xf32>
    %9 = arith.subf %3, %8 : vector<1x8x16xf32>
    %cst_5 = arith.constant dense<0.000000e+00> : vector<1x16xf32>
    %10 = vector.multi_reduction <add>, %9, %cst_5 [1] : vector<1x8x16xf32> to vector<1x16xf32>
    %c0_6 = arith.constant 0 : index
    %c0_7 = arith.constant 0 : index
    %c0_8 = arith.constant 0 : index
    %11 = vector.load %arg5[%c0_6, %c0_7, %c0_8] : memref<1x1x16xf32, #tpu.memory_space<vmem>>, vector<1x1x16xf32>
    %12 = vector.shape_cast %11 : vector<1x1x16xf32> to vector<1x16xf32>
    %13 = arith.mulf %10, %12 : vector<1x16xf32>
    %c0_9 = arith.constant 0 : index
    %c0_10 = arith.constant 0 : index
    %c0_11 = arith.constant 0 : index
    %14 = vector.load %arg6[%c0_9, %c0_10, %c0_11] : memref<1x1x16xf32, #tpu.memory_space<vmem>>, vector<1x1x16xf32>
    %15 = vector.shape_cast %14 : vector<1x1x16xf32> to vector<1x16xf32>
    %cst_12 = arith.constant dense<0.000000e+00> : vector<16xf32>
    %16 = vector.multi_reduction <add>, %13, %cst_12 [0] : vector<1x16xf32> to vector<16xf32>
    %17 = vector.shape_cast %16 : vector<16xf32> to vector<1x16xf32>
    %18 = arith.addf %15, %17 : vector<1x16xf32>
    %c0_13 = arith.constant 0 : index
    %c0_14 = arith.constant 0 : index
    %c0_15 = arith.constant 0 : index
    %19 = vector.load %arg6[%c0_13, %c0_14, %c0_15] : memref<1x1x16xf32, #tpu.memory_space<vmem>>, vector<1x1x16xf32>
    %20 = vector.shape_cast %19 : vector<1x1x16xf32> to vector<1x16xf32>
    %21 = vector.shape_cast %18 : vector<1x16xf32> to vector<1x1x16xf32>
    tpu.vector_store %arg6[%c0_13, %c0_14, %c0_15], %21 {strides = array<i32>} : memref<1x1x16xf32, #tpu.memory_space<vmem>>, vector<1x1x16xf32>,
    return
  }
  func.func @transform_0(%arg0: i32, %arg1: i32, %arg2: i32) -> (i32, i32, i32) {
    %c0_i32 = arith.constant 0 : i32
    return %arg1, %arg2, %arg0 : i32, i32, i32
  }
  func.func @transform_1(%arg0: i32, %arg1: i32, %arg2: i32) -> (i32, i32, i32) {
    %c0_i32 = arith.constant 0 : i32
    %c0_i32_0 = arith.constant 0 : i32
    return %arg1, %c0_i32, %arg0 : i32, i32, i32
  }
  func.func @transform_2(%arg0: i32, %arg1: i32, %arg2: i32) -> (i32, i32, i32) {
    %c0_i32 = arith.constant 0 : i32
    %c0_i32_0 = arith.constant 0 : i32
    return %arg1, %c0_i32, %arg0 : i32, i32, i32
  }
  func.func @transform_3(%arg0: i32, %arg1: i32, %arg2: i32) -> (i32, i32, i32) {
    %c0_i32 = arith.constant 0 : i32
    %c0_i32_0 = arith.constant 0 : i32
    return %arg1, %c0_i32, %arg0 : i32, i32, i32
  }
}

</mosaic_0001>

<llo_original>
// kernel: tpu_custom_call.1
$region0: #{tpu_custom_call.1}
  #allocation0 [shape = 'u32[]', space=smem, size = 0x4, offset = 0x4, fixed_abs, tag = 'smem constant byte address 0x4 - core index']
  #allocation1 [shape = 'u32[144,128]{1,0:T(1,128)}', space=vmem, size = 0x12000, scoped, tag = 'internal scratch']
  %s0 = inlined_call_operand.vmem [shape: f32[2,8,16], index: 0, kind: input, shape index: {}]
  %s1 = inlined_call_operand.vmem [shape: f32[2,10,16], index: 1, kind: input, shape index: {}]
  %s2 = inlined_call_operand.vmem [shape: f32[2,1,16], index: 2, kind: input, shape index: {}]
  %s3 = inlined_call_operand.hbm [shape: f32[2,1,16], index: 3, kind: output, shape index: {}]
  %s4 = sld [smem:[#allocation0]]
  $region49: #{tpu_custom_call.1} parent=0
    _
  %s6 = ssub.s32 1, %s4
  %s7 = scalar_select 0, %s6, %s4
  $region1: #{tpu_custom_call.1} parent=0
    #allocation2 [shape = 'u8[1024]{0}', space=vmem, size = 0x400, scoped, tag = 'output window, operand 0']
    #allocation3 [shape = 's32[2]{0}', space=sflag, size = 0x8, scoped, tag = 'scoped memory for tpu_custom_call.1']
    %8 = vsyncpa [#allocation3], 0
    %s9 = scalar_lea.sflag [#allocation3], 1
    %10 = vsyncpa %s9, 0
    loop: start=0, step=1, limit=4
    $region2: #{tpu_custom_call.1} parent=1 // loop_pre_header
      _
    $region3: #{tpu_custom_call.1} parent=1 // loop_header
      %s12 = sphi 0, %s16
      %p13 = scmp.ge.s32.totalorder %s12, 4
      %s19 = sphi 0, %s38
      %s20 = sphi 0, %s34
      %s21 = sphi 0, %s30
      %s22 = sphi 0, %s19
      %s23 = sphi 0, %s20
      %s24 = sphi 0, %s21
      %s25 = sphi 0, %s22
      %s26 = sphi 0, %s23
      %s27 = sphi 0, %s24
      %s45 = sphi 0, %s47
      %s48 = sphi 0, %s45
      %s49 = sphi 0, %s48
      %s65 = sphi 0, %s49
      %s73 = sphi 0, %s75
      %s76 = sphi 0, %s73
      %s77 = sphi 0, %s76
      %s93 = sphi 0, %s77
      %s101 = sphi 0, %s103
      %s104 = sphi 0, %s101
      %s105 = sphi 0, %s104
      %s121 = sphi 0, %s105
      %s129 = sphi 0, %s131
      %s132 = sphi 0, %s129
      %s133 = sphi 0, %s132
      %s149 = sphi 0, %s133
    $region4: #{tpu_custom_call.1} parent=1 // loop_header_branch
      %15 = sbr.rel (%p13) target = $region8
    $region5: #{tpu_custom_call.1} parent=1 // loop_body
      %s17 = ssub.s32 %s12, 1
      %s18 = ssub.s32 %s12, 2
      %s28 = sadd.s32 1, %s21
      %p29 = scmp.ge.s32.totalorder %s28, 1
      %s30 = scalar_select %p29, 0, %s28
      %s31 = sadd.s32 1, %s20
      %s32 = scalar_select %p29, %s31, %s20
      %p33 = scmp.ge.s32.totalorder %s32, 2
      %s34 = scalar_select %p33, 0, %s32
      %s35 = sadd.s32 1, %s19
      %s36 = scalar_select %p33, %s35, %s19
      %p37 = scmp.ge.s32.totalorder %s36, 1
      %s38 = scalar_select %p37, 0, %s36
      %s39 = ssub.s32 %s20, %s34
      %s40 = ssub.s32 %s21, %s30
      %s41 = sor.u32 %s39, %s40
      %s42 = ssub.s32 %s19, %s38
      %s43 = sor.u32 %s41, %s42
      %p44 = scmp.eq.s32.totalorder %s43, 0
      %s46 = sadd.s32 %s45, 1
      %s47 = scalar_select %p44, %s45, %s46
      %p50 = pneg %p44
      %p51 = scmp.eq.s32.totalorder %s12, 1
      %p52 = por %p50, %p51
      %p53 = scmp.ne.s32.totalorder %s45, %s48
      %p54 = scmp.eq.s32.totalorder %s12, 0
      %p55 = por %p53, %p54
      %p56 = scmp.ne.s32.totalorder %s45, %s48
      %p57 = scmp.eq.s32.totalorder %s17, 1
      %p58 = por %p56, %p57
      %p59 = scmp.ne.s32.totalorder %s48, %s49
      %p60 = scmp.eq.s32.totalorder %s17, 0
      %p61 = por %p59, %p60
      %p62 = scmp.ne.s32.totalorder %s48, %s49
      %p63 = scmp.eq.s32.totalorder %s18, 1
      %p64 = por %p62, %p63
      %p66 = scmp.ne.s32.totalorder %s49, %s65
      %p67 = scmp.eq.s32.totalorder %s18, 0
      %p68 = por %p66, %p67
      %s69 = ssub.s32 %s20, %s34
      %s70 = ssub.s32 %s19, %s38
      %s71 = sor.u32 %s69, %s70
      %p72 = scmp.eq.s32.totalorder %s71, 0
      %s74 = sadd.s32 %s73, 1
      %s75 = scalar_select %p72, %s73, %s74
      %p78 = pneg %p72
      %p79 = scmp.eq.s32.totalorder %s12, 1
      %p80 = por %p78, %p79
      %p81 = scmp.ne.s32.totalorder %s73, %s76
      %p82 = scmp.eq.s32.totalorder %s12, 0
      %p83 = por %p81, %p82
      %p84 = scmp.ne.s32.totalorder %s73, %s76
      %p85 = scmp.eq.s32.totalorder %s17, 1
      %p86 = por %p84, %p85
      %p87 = scmp.ne.s32.totalorder %s76, %s77
      %p88 = scmp.eq.s32.totalorder %s17, 0
      %p89 = por %p87, %p88
      %p90 = scmp.ne.s32.totalorder %s76, %s77
      %p91 = scmp.eq.s32.totalorder %s18, 1
      %p92 = por %p90, %p91
      %p94 = scmp.ne.s32.totalorder %s77, %s93
      %p95 = scmp.eq.s32.totalorder %s18, 0
      %p96 = por %p94, %p95
      %s97 = ssub.s32 %s20, %s34
      %s98 = ssub.s32 %s19, %s38
      %s99 = sor.u32 %s97, %s98
      %p100 = scmp.eq.s32.totalorder %s99, 0
      %s102 = sadd.s32 %s101, 1
      %s103 = scalar_select %p100, %s101, %s102
      %p106 = pneg %p100
      %p107 = scmp.eq.s32.totalorder %s12, 1
      %p108 = por %p106, %p107
      %p109 = scmp.ne.s32.totalorder %s101, %s104
      %p110 = scmp.eq.s32.totalorder %s12, 0
      %p111 = por %p109, %p110
      %p112 = scmp.ne.s32.totalorder %s101, %s104
      %p113 = scmp.eq.s32.totalorder %s17, 1
      %p114 = por %p112, %p113
      %p115 = scmp.ne.s32.totalorder %s104, %s105
      %p116 = scmp.eq.s32.totalorder %s17, 0
      %p117 = por %p115, %p116
      %p118 = scmp.ne.s32.totalorder %s104, %s105
      %p119 = scmp.eq.s32.totalorder %s18, 1
      %p120 = por %p118, %p119
      %p122 = scmp.ne.s32.totalorder %s105, %s121
      %p123 = scmp.eq.s32.totalorder %s18, 0
      %p124 = por %p122, %p123
      %s125 = ssub.s32 %s20, %s34
      %s126 = ssub.s32 %s19, %s38
      %s127 = sor.u32 %s125, %s126
      %p128 = scmp.eq.s32.totalorder %s127, 0
      %s130 = sadd.s32 %s129, 1
      %s131 = scalar_select %p128, %s129, %s130
      %p134 = pneg %p128
      %p135 = scmp.eq.s32.totalorder %s12, 1
      %p136 = por %p134, %p135
      %p137 = scmp.ne.s32.totalorder %s129, %s132
      %p138 = scmp.eq.s32.totalorder %s12, 0
      %p139 = por %p137, %p138
      %p140 = scmp.ne.s32.totalorder %s129, %s132
      %p141 = scmp.eq.s32.totalorder %s17, 1
      %p142 = por %p140, %p141
      %p143 = scmp.ne.s32.totalorder %s132, %s133
      %p144 = scmp.eq.s32.totalorder %s17, 0
      %p145 = por %p143, %p144
      %p146 = scmp.ne.s32.totalorder %s132, %s133
      %p147 = scmp.eq.s32.totalorder %s18, 1
      %p148 = por %p146, %p147
      %p150 = scmp.ne.s32.totalorder %s133, %s149
      %p151 = scmp.eq.s32.totalorder %s18, 0
      %p152 = por %p150, %p151
      %p153 = scmp.le.s32.totalorder 1, %s12
      %p154 = scmp.lt.s32.totalorder %s12, 3
      %p155 = pnand %p153, %p154
      %p156 = pneg %p155
      // Predicated region
      $region9: #{tpu_custom_call.1} parent=5 // pred_check
        _
      $region10: #{tpu_custom_call.1} parent=5 // pred_check_branch
        %158 = sbr.rel (%p155) target = $region12
      $region11: #{tpu_custom_call.1} parent=5 // pred_region
        %s159 = ssub.s32 %s12, 1
      $region12: #{tpu_custom_call.1} parent=5 // pred_fallthru
        _
      %p160 = scmp.lt.s32.totalorder %s12, 2
      // Predicated region
      $region13: #{tpu_custom_call.1} parent=5 // pred_check
        %p161 = pneg %p160
      $region14: #{tpu_custom_call.1} parent=5 // pred_check_branch
        %163 = sbr.rel (%p161) target = $region16
      $region15: #{tpu_custom_call.1} parent=5 // pred_region
        // Predicated region
        $region17: #{tpu_custom_call.1} parent=15 // pred_check
          %p164 = pneg %p55
        $region18: #{tpu_custom_call.1} parent=15 // pred_check_branch
          %166 = sbr.rel (%p164) target = $region20
        $region19: #{tpu_custom_call.1} parent=15 // pred_region
          %p167 = scmp.lt.s32.totalorder %s20, 1
          %s168 = scalar_select %p167, %s20, 1
          %p169 = scmp.lt.s32.totalorder %s21, 0
          %s170 = scalar_select %p169, %s21, 0
          %p171 = scmp.lt.s32.totalorder %s19, 0
          %s172 = scalar_select %p171, %s19, 0
          %s173 = sadd.s32 %s172, %s170
          %s174 = sadd.s32 %s173, %s168
          %s175 = smul.addr %s174, 8
          %s176 = scalar_lea.vmem %s0, %s175
        $region20: #{tpu_custom_call.1} parent=15 // pred_fallthru
          _
        // Predicated region
        $region21: #{tpu_custom_call.1} parent=15 // pred_check
          %p177 = pneg %p83
        $region22: #{tpu_custom_call.1} parent=15 // pred_check_branch
          %179 = sbr.rel (%p177) target = $region24
        $region23: #{tpu_custom_call.1} parent=15 // pred_region
          %p180 = scmp.lt.s32.totalorder %s20, 1
          %s181 = scalar_select %p180, %s20, 1
          %p182 = scmp.lt.s32.totalorder %s19, 0
          %s183 = scalar_select %p182, %s19, 0
          %s184 = smul.addr %s181, 2
          %s185 = sadd.s32 %s183, %s184
          %s186 = smul.addr %s185, 8
          %s187 = scalar_lea.vmem %s1, %s186
        $region24: #{tpu_custom_call.1} parent=15 // pred_fallthru
          _
        // Predicated region
        $region25: #{tpu_custom_call.1} parent=15 // pred_check
          %p188 = pneg %p111
        $region26: #{tpu_custom_call.1} parent=15 // pred_check_branch
          %190 = sbr.rel (%p188) target = $region28
        $region27: #{tpu_custom_call.1} parent=15 // pred_region
          %p191 = scmp.lt.s32.totalorder %s20, 1
          %s192 = scalar_select %p191, %s20, 1
          %p193 = scmp.lt.s32.totalorder %s19, 0
          %s194 = scalar_select %p193, %s19, 0
          %s195 = sadd.s32 %s194, %s192
          %s196 = scalar_lea.vmem %s2, %s195
        $region28: #{tpu_custom_call.1} parent=15 // pred_fallthru
          _
      $region16: #{tpu_custom_call.1} parent=5 // pred_fallthru
        _
      %p197 = scmp.le.s32.totalorder 1, %s12
      %p198 = scmp.lt.s32.totalorder %s12, 3
      %p199 = pnand %p197, %p198
      %p200 = pneg %p199
      // Predicated region
      $region29: #{tpu_custom_call.1} parent=5 // pred_check
        _
      $region30: #{tpu_custom_call.1} parent=5 // pred_check_branch
        %202 = sbr.rel (%p199) target = $region32
      $region31: #{tpu_custom_call.1} parent=5 // pred_region
        %s203 = ssub.s32 %s12, 1
        %p204 = scmp.lt.s32.totalorder %s23, 1
        %s205 = scalar_select %p204, %s23, 1
        %p206 = scmp.lt.s32.totalorder %s24, 0
        %s207 = scalar_select %p206, %s24, 0
        %p208 = scmp.lt.s32.totalorder %s22, 0
        %s209 = scalar_select %p208, %s22, 0
        %s210 = sadd.s32 %s209, %s207
        %s211 = sadd.s32 %s210, %s205
        %s212 = smul.addr %s211, 8
        %s213 = scalar_lea.vmem %s0, %s212
        %p214 = pneg %p61
        %p215 = pneg %p58
        %p216 = scmp.lt.s32.totalorder %s23, 1
        %s217 = scalar_select %p216, %s23, 1
        %p218 = scmp.lt.s32.totalorder %s22, 0
        %s219 = scalar_select %p218, %s22, 0
        %s220 = smul.addr %s217, 2
        %s221 = sadd.s32 %s219, %s220
        %s222 = smul.addr %s221, 8
        %s223 = scalar_lea.vmem %s1, %s222
        %p224 = pneg %p89
        %p225 = pneg %p86
        %p226 = scmp.lt.s32.totalorder %s23, 1
        %s227 = scalar_select %p226, %s23, 1
        %p228 = scmp.lt.s32.totalorder %s22, 0
        %s229 = scalar_select %p228, %s22, 0
        %s230 = sadd.s32 %s229, %s227
        %s231 = scalar_lea.vmem %s2, %s230
        %p232 = pneg %p117
        %p233 = pneg %p114
        %p234 = pneg %p145
        %p235 = pneg %p142
        %s236 = sand.u32 %s132, 1
        %s237 = scalar_lea.sflag [#allocation3], %s236
        %s238 = sand.u32 %s132, 1
        %s239 = scalar_lea.vmem [#allocation2], %s238
        %p240 = scmp.lt.s32.totalorder %s23, 1
        %s241 = scalar_select %p240, %s23, 1
        %p242 = scmp.lt.s32.totalorder %s24, 0
        %s243 = scalar_select %p242, %s24, 0
        %p244 = scmp.lt.s32.totalorder %s22, 0
        %s245 = scalar_select %p244, %s22, 0
        %s246 = sadd.s32 %s245, %s243
        %s247 = sadd.s32 %s246, %s241
        %s248 = smul.addr %s247, 8
        %s249 = scalar_lea.vmem %s0, %s248
        %p250 = scmp.lt.s32.totalorder %s23, 1
        %s251 = scalar_select %p250, %s23, 1
        %p252 = scmp.lt.s32.totalorder %s22, 0
        %s253 = scalar_select %p252, %s22, 0
        %s254 = smul.addr %s251, 2
        %s255 = sadd.s32 %s253, %s254
        %s256 = smul.addr %s255, 8
        %s257 = scalar_lea.vmem %s1, %s256
        %p258 = scmp.lt.s32.totalorder %s23, 1
        %s259 = scalar_select %p258, %s23, 1
        %p260 = scmp.lt.s32.totalorder %s22, 0
        %s261 = scalar_select %p260, %s22, 0
        %s262 = sadd.s32 %s261, %s259
        %s263 = scalar_lea.vmem %s2, %s262
        %p264 = scmp.eq.s32.totalorder %s24, 0
        // Predicated region
        $region33: #{tpu_custom_call.1} parent=31 // pred_check
          %p265 = pneg %p264
        $region34: #{tpu_custom_call.1} parent=31 // pred_check_branch
          %267 = sbr.rel (%p265) target = $region36
        $region35: #{tpu_custom_call.1} parent=31 // pred_region
          %vm268 = vcmask 122880
          %269 = vst.msk [vmem:[%s239] sm:$0x1] %vm268, 0.0
        $region36: #{tpu_custom_call.1} parent=31 // pred_fallthru
          _
        %v270 = vld [vmem:[%s249] sm:$0xff]
        %v271 = vld [vmem:[%s257 + $0x2] sm:$0xff]
        %v272 = vadd.f32 %v270, 1e-16
        %v273 = vlog2.pop %v272
        %v274 = vmul.f32 %v273, 0.6931472
        %v275 = vmul.f32 %v271, %v274
        %v276 = vsub.f32 %v270, %v275
        %vm277 = vcmask 130048
        %v278 = vsel %vm277, %v276, 0.0
        %v279 = vrot.slane %v278, 4
        %v280 = vadd.f32 %v278, %v279
        %v281 = vrot.slane %v280, 2
        %v282 = vadd.f32 %v280, %v281
        %v283 = vrot.slane %v282, 1
        %v284 = vadd.f32 %v282, %v283
        %v285 = vld [vmem:[%s263] sm:$0x1]
        %v286 = vmul.f32 %v284, %v285
        %v287 = vld [vmem:[%s239] sm:$0x1]
        %v288 = vadd.f32 %v286, 0.0
        %v289 = vadd.f32 %v287, %v288
        %vm290 = vcmask 122880
        %291 = vst.msk [vmem:[%s239] sm:$0x1] %vm290, %v289
        %s292 = sand.u32 %s132, 1
        %s293 = scalar_lea.sflag [#allocation3], %s292
        %s294 = sand.u32 %s132, 1
        %s295 = scalar_lea.vmem [#allocation2], %s294
        // Predicated region
        $region37: #{tpu_custom_call.1} parent=31 // pred_check
          %p296 = pneg %p142
        $region38: #{tpu_custom_call.1} parent=31 // pred_check_branch
          %298 = sbr.rel (%p296) target = $region40
        $region39: #{tpu_custom_call.1} parent=31 // pred_region
          %s300 = ssub.s32 16, 16
          %301 = vsyncadd %s293, %s300
          %s302 = sadd.s32 %s22, %s23
          %s303 = smul.addr %s302, 16
          %s304 = scalar_lea.hbm %s3, %s303
          %s306 = sshll.u32 %s295, 4
          %s307 = int_to_ptr.vmem [resolvable:$true] %s306
          %309 = dma.vmem_to_hbm [thread:$0]  %s307, 16, %s304, %s293
        $region40: #{tpu_custom_call.1} parent=31 // pred_fallthru
          _
      $region32: #{tpu_custom_call.1} parent=5 // pred_fallthru
        _
      %p310 = scmp.le.s32.totalorder 2, %s12
      // Predicated region
      $region41: #{tpu_custom_call.1} parent=5 // pred_check
        %p311 = pneg %p310
      $region42: #{tpu_custom_call.1} parent=5 // pred_check_branch
        %313 = sbr.rel (%p311) target = $region44
      $region43: #{tpu_custom_call.1} parent=5 // pred_region
        %s314 = ssub.s32 %s12, 2
        // Predicated region
        $region45: #{tpu_custom_call.1} parent=43 // pred_check
          %p315 = pneg %p148
        $region46: #{tpu_custom_call.1} parent=43 // pred_check_branch
          %317 = sbr.rel (%p315) target = $region48
        $region47: #{tpu_custom_call.1} parent=43 // pred_region
          %s318 = sand.u32 %s133, 1
          %s319 = scalar_lea.sflag [#allocation3], %s318
          %s320 = sand.u32 %s133, 1
          %s321 = scalar_lea.vmem [#allocation2], %s320
          %322 = dma.done %s319, 16
        $region48: #{tpu_custom_call.1} parent=43 // pred_fallthru
          _
      $region44: #{tpu_custom_call.1} parent=5 // pred_fallthru
        _
    $region6: #{tpu_custom_call.1} parent=1 // loop_footer
      %s16 = sadd.s32 1, %s12
    $region7: #{tpu_custom_call.1} parent=1 // loop_footer_branch
      %11 = sbr.rel target = $region3
    $region8: #{tpu_custom_call.1} parent=1 // loop_exit
      _
    %323 = vsyncpa [#allocation3], 1
    %s324 = scalar_lea.sflag [#allocation3], 1
    %325 = vsyncpa %s324, 1

</llo_original>
